<compile_context>
chip_gen: v7x
topology: tpu7x:2x2x1
jax: 0.10.0
libtpu: 0.0.40
codegen_flags: <defaults>
</compile_context>

<pallas_src>
import math

import jax
import jax.numpy as jnp
from jax import lax
from jax.experimental import pallas as pl
from jax.experimental.pallas import tpu as pltpu

_INV_SQRT2 = 1.0 / math.sqrt(2.0)


def _ceil_to(a, b):
    return -(-a // b) * b


def _mlp_kernel(x_ref, w1_ref, b1_ref, w2_ref, b2_ref, o_ref, g_ref):
    """One (row-tile i, W2-column-panel j) grid step.

    g_ref is a [tm, H] f32 scratch holding GELU(x @ W1 + b1) for the current
    row tile; it is computed once at j == 0 and reused for every W2 panel.
    """
    j = pl.program_id(1)

    @pl.when(j == 0)
    def _():
        h = jnp.dot(x_ref[...], w1_ref[...], preferred_element_type=jnp.float32)
        h = h + b1_ref[...].astype(jnp.float32)
        # Exact GELU (PyTorch nn.GELU default): 0.5 * x * (1 + erf(x / sqrt(2)))
        g_ref[...] = 0.5 * h * (1.0 + lax.erf(h * _INV_SQRT2))

    g = g_ref[...]
    o = jnp.dot(g.astype(w2_ref.dtype), w2_ref[...],
                preferred_element_type=jnp.float32)
    o = o + b2_ref[...].astype(jnp.float32)
    o_ref[...] = o.astype(o_ref.dtype)


def projection_module(x, w1, b1, w2, b2, *, tm=256, tn=None):
    """x: [..., mm_hidden]; w1: [mm_hidden, hidden]; b1: [hidden];
    w2: [hidden, hidden]; b2: [hidden].  Returns [..., hidden].

    tm: row tile (rounded to the sublane granule, clamped to the row count).
    tn: optional W2 column-panel width (multiple of 128 dividing hidden) for
        large hidden sizes that don't fit VMEM fully resident (e.g. v7x).
        If None, it is chosen automatically.
    """
    orig_shape = x.shape
    K = orig_shape[-1]
    H = w1.shape[1]
    assert w1.shape == (K, H), (w1.shape, K, H)
    assert w2.shape == (H, H), (w2.shape, H)

    x2d = x.reshape(-1, K)
    M = x2d.shape[0]

    x_isz = jnp.dtype(x.dtype).itemsize
    w_isz = jnp.dtype(w1.dtype).itemsize
    b1_isz = jnp.dtype(b1.dtype).itemsize
    b2_isz = jnp.dtype(b2.dtype).itemsize
    o_isz = x_isz

    # Sublane granule: 8 rows for 4-byte, 16 for 2-byte (bf16), 32 for 1-byte.
    sub = {4: 8, 2: 16, 1: 32}.get(x_isz, 8)
    tm = max(sub, (int(tm) // sub) * sub)
    # Clamp tm so small inputs don't force a big pad-to-tile HBM copy.
    m_rounded = _ceil_to(M, sub)
    tm = min(tm, m_rounded)

    M_pad = _ceil_to(M, tm)
    if M_pad != M:
        # Pads at most (tm - 1) rows of the flattened input.
        x2d = jnp.pad(x2d, ((0, M_pad - M), (0, 0)))

    # Rough double-buffered VMEM plan for a given (tm, tn).
    def plan_bytes(tm_, tn_):
        return (2 * K * H * w_isz + 2 * H * b1_isz       # W1, b1 (resident)
                + 2 * H * tn_ * w_isz + 2 * tn_ * b2_isz  # W2, b2 panels
                + 2 * tm_ * K * x_isz                     # x row tiles
                + 2 * tm_ * tn_ * o_isz                   # output tiles
                + tm_ * H * 4)                            # f32 GELU scratch

    # W2 column-panel width: full H if it fits comfortably, else stream panels.
    budget = 48 << 20  # conservative across v5e/v6e (128 MiB) and v7x (64 MiB)
    if tn is None:
        tn = H
        if plan_bytes(tm, H) > budget and H % 128 == 0:
            for cand in range(H - 128, 0, -128):
                if H % cand == 0 and plan_bytes(tm, cand) <= budget:
                    tn = cand
                    break
            else:
                tn = 128
    if tn >= H:
        tn = H
    else:
        assert tn % 128 == 0 and H % tn == 0, (
            "tn must divide H and be a multiple of 128 when streaming W2")
    n_j = H // tn

    b1_2d = b1.reshape(1, H)
    b2_2d = b2.reshape(1, H)

    cost = pl.CostEstimate(
        flops=int(2 * M_pad * H * (K + H)),
        transcendentals=int(M_pad * H),
        bytes_accessed=int(
            M_pad * K * x_isz
            + w1.size * w_isz + b1.size * b1_isz
            + w2.size * w_isz + b2.size * b2_isz
            + M_pad * H * o_isz),
    )

    vmem_need = plan_bytes(tm, tn)
    vmem_limit = None
    if vmem_need > (16 << 20):
        # Raise above the default scoped limit (16/32 MiB), with headroom.
        vmem_limit = min(int(vmem_need * 5 // 4) + (1 << 20), 120 << 20)

    grid_spec = pltpu.PrefetchScalarGridSpec(
        num_scalar_prefetch=0,
        grid=(M_pad // tm, n_j),
        in_specs=[
            pl.BlockSpec((tm, K), lambda i, j: (i, 0)),   # x row tile
            pl.BlockSpec((K, H), lambda i, j: (0, 0)),    # W1 (stationary)
            pl.BlockSpec((1, H), lambda i, j: (0, 0)),    # b1 (stationary)
            pl.BlockSpec((H, tn), lambda i, j: (0, j)),   # W2 column panel
            pl.BlockSpec((1, tn), lambda i, j: (0, j)),   # b2 panel
        ],
        out_specs=pl.BlockSpec((tm, tn), lambda i, j: (i, j)),
        scratch_shapes=[pltpu.VMEM((tm, H), jnp.float32)],  # GELU intermediate
    )

    out = pl.pallas_call(
        _mlp_kernel,
        out_shape=jax.ShapeDtypeStruct((M_pad, H), x.dtype),
        grid_spec=grid_spec,
        compiler_params=pltpu.CompilerParams(
            dimension_semantics=("parallel", "arbitrary"),
            vmem_limit_bytes=vmem_limit,
        ),
        cost_estimate=cost,
    )(x2d, w1, b1_2d, w2, b2_2d)

    out = out[:M]
    return out.reshape(*orig_shape[:-1], H)


def init_params(key, mm_hidden_size, hidden_size, dtype=jnp.float32):
    """PyTorch nn.Linear-style init (uniform +-1/sqrt(fan_in)), stored as [in, out]."""
    k1, k2, k3, k4 = jax.random.split(key, 4)
    lim1 = 1.0 / math.sqrt(mm_hidden_size)
    lim2 = 1.0 / math.sqrt(hidden_size)
    w1 = jax.random.uniform(k1, (mm_hidden_size, hidden_size), dtype, -lim1, lim1)
    b1 = jax.random.uniform(k2, (hidden_size,), dtype, -lim1, lim1)
    w2 = jax.random.uniform(k3, (hidden_size, hidden_size), dtype, -lim2, lim2)
    b2 = jax.random.uniform(k4, (hidden_size,), dtype, -lim2, lim2)
    return w1, b1, w2, b2


def _reference(x, w1, b1, w2, b2):
    h = x @ w1 + b1
    g = 0.5 * h * (1.0 + lax.erf(h * _INV_SQRT2))
    return g @ w2 + b2


if __name__ == "__main__":
    key = jax.random.PRNGKey(0)
    kx1, kx2, kx3, kp1, kp2 = jax.random.split(key, 5)

    # Case 1: small shapes implied by the module (batch=2, seq=8, mm_hidden=32 -> hidden=32).
    batch, seq, mm_hidden, hidden = 2, 8, 32, 32
    x = jax.random.normal(kx1, (batch, seq, mm_hidden), jnp.float32)
    w1, b1, w2, b2 = init_params(kp1, mm_hidden, hidden)
    y = jax.block_until_ready(projection_module(x, w1, b1, w2, b2))
    assert y.shape == (batch, seq, hidden)
    assert jnp.allclose(y, _reference(x, w1, b1, w2, b2), atol=1e-5, rtol=1e-5)

    # Case 2: row count not a multiple of the tile (exercises the tail-pad path).
    x2 = jax.random.normal(kx2, (3, 5, mm_hidden), jnp.float32)
    y2 = jax.block_until_ready(projection_module(x2, w1, b1, w2, b2))
    assert y2.shape == (3, 5, hidden)
    assert jnp.allclose(y2, _reference(x2, w1, b1, w2, b2), atol=1e-5, rtol=1e-5)

    # Case 3: W2 column-panel streaming (tn < H) with the GELU intermediate in
    # scratch — the VMEM-bounded plan used for large hidden sizes (e.g. v7x).
    mm_hidden3, hidden3 = 64, 256
    x3 = jax.random.normal(kx3, (2, 16, mm_hidden3), jnp.float32)
    w13, b13, w23, b23 = init_params(kp2, mm_hidden3, hidden3)
    y3 = jax.block_until_ready(projection_module(x3, w13, b13, w23, b23, tn=128))
    assert y3.shape == (2, 16, hidden3)
    assert jnp.allclose(y3, _reference(x3, w13, b13, w23, b23), atol=5e-4, rtol=5e-4)

    print("KERNEL_OK")
</pallas_src>

<mosaic_0001>
module attributes {stable_mosaic.version = 11 : i64} {
  func.func @_mlp_kernel(%arg0: i32, %arg1: i32, %arg2: memref<16x32xf32, #tpu.memory_space<vmem>>, %arg3: memref<32x32xf32, #tpu.memory_space<vmem>>, %arg4: memref<1x32xf32, #tpu.memory_space<vmem>>, %arg5: memref<32x32xf32, #tpu.memory_space<vmem>>, %arg6: memref<1x32xf32, #tpu.memory_space<vmem>>, %arg7: memref<16x32xf32, #tpu.memory_space<vmem>>, %arg8: memref<16x32xf32, #tpu.memory_space<vmem>>) attributes {dimension_semantics = [#tpu.dimension_semantics<parallel>, #tpu.dimension_semantics<arbitrary>], iteration_bounds = array<i64: 1, 1>, scalar_prefetch = 0 : i64, scratch_operands = 1 : i64, tpu.core_type = #tpu.core_type<tc>, window_params = [{transform_indices = @transform_0, window_bounds = array<i64: 16, 32>}, {pipeline_mode = #tpu.pipeline_mode<synchronous>, transform_indices = @transform_1, window_bounds = array<i64: 32, 32>}, {pipeline_mode = #tpu.pipeline_mode<synchronous>, transform_indices = @transform_2, window_bounds = array<i64: 1, 32>}, {transform_indices = @transform_3, window_bounds = array<i64: 32, 32>}, {transform_indices = @transform_4, window_bounds = array<i64: 1, 32>}, {transform_indices = @transform_5, window_bounds = array<i64: 16, 32>}]} {
    %c0_i32 = arith.constant 0 : i32
    %0 = arith.cmpi eq, %arg1, %c0_i32 : i32
    %1 = arith.extui %0 : i1 to i32
    %c0_i32_0 = arith.constant 0 : i32
    %2 = arith.cmpi ne, %1, %c0_i32_0 : i32
    scf.if %2 {
      %c0_8 = arith.constant 0 : index
      %c0_9 = arith.constant 0 : index
      %10 = vector.load %arg2[%c0_8, %c0_9] : memref<16x32xf32, #tpu.memory_space<vmem>>, vector<16x32xf32>
      %c0_10 = arith.constant 0 : index
      %c0_11 = arith.constant 0 : index
      %11 = vector.load %arg3[%c0_10, %c0_11] : memref<32x32xf32, #tpu.memory_space<vmem>>, vector<32x32xf32>
      %cst_12 = arith.constant dense<0.000000e+00> : vector<16x32xf32>
      %12 = tpu.matmul %10, %11, %cst_12 {dimension_numbers = #tpu.dot_dimension_numbers<[1], [0], [0], [1], [0, 0, 1, 1], [], []>} : vector<16x32xf32>, vector<32x32xf32>, vector<16x32xf32> -> vector<16x32xf32>
      %c0_13 = arith.constant 0 : index
      %c0_14 = arith.constant 0 : index
      %13 = vector.load %arg4[%c0_13, %c0_14] : memref<1x32xf32, #tpu.memory_space<vmem>>, vector<1x32xf32>
      %14 = vector.broadcast %13 : vector<1x32xf32> to vector<16x32xf32>
      %15 = arith.addf %12, %14 : vector<16x32xf32>
      %cst_15 = arith.constant 5.000000e-01 : f32
      %16 = vector.broadcast %cst_15 : f32 to vector<16x32xf32>
      %17 = arith.mulf %16, %15 : vector<16x32xf32>
      %cst_16 = arith.constant 0.707106769 : f32
      %18 = vector.broadcast %cst_16 : f32 to vector<16x32xf32>
      %19 = arith.mulf %15, %18 : vector<16x32xf32>
      %20 = math.erf %19 : vector<16x32xf32>
      %cst_17 = arith.constant 1.000000e+00 : f32
      %21 = vector.broadcast %cst_17 : f32 to vector<16x32xf32>
      %22 = arith.addf %21, %20 : vector<16x32xf32>
      %23 = arith.mulf %17, %22 : vector<16x32xf32>
      %c0_18 = arith.constant 0 : index
      %c0_19 = arith.constant 0 : index
      %24 = vector.load %arg8[%c0_18, %c0_19] : memref<16x32xf32, #tpu.memory_space<vmem>>, vector<16x32xf32>
      tpu.vector_store %arg8[%c0_18, %c0_19], %23 {strides = array<i32>} : memref<16x32xf32, #tpu.memory_space<vmem>>, vector<16x32xf32>,
    } else {
    }
    %c0 = arith.constant 0 : index
    %c0_1 = arith.constant 0 : index
    %3 = vector.load %arg8[%c0, %c0_1] : memref<16x32xf32, #tpu.memory_space<vmem>>, vector<16x32xf32>
    %c0_2 = arith.constant 0 : index
    %c0_3 = arith.constant 0 : index
    %4 = vector.load %arg5[%c0_2, %c0_3] : memref<32x32xf32, #tpu.memory_space<vmem>>, vector<32x32xf32>
    %cst = arith.constant dense<0.000000e+00> : vector<16x32xf32>
    %5 = tpu.matmul %3, %4, %cst {dimension_numbers = #tpu.dot_dimension_numbers<[1], [0], [0], [1], [0, 0, 1, 1], [], []>} : vector<16x32xf32>, vector<32x32xf32>, vector<16x32xf32> -> vector<16x32xf32>
    %c0_4 = arith.constant 0 : index
    %c0_5 = arith.constant 0 : index
    %6 = vector.load %arg6[%c0_4, %c0_5] : memref<1x32xf32, #tpu.memory_space<vmem>>, vector<1x32xf32>
    %7 = vector.broadcast %6 : vector<1x32xf32> to vector<16x32xf32>
    %8 = arith.addf %5, %7 : vector<16x32xf32>
    %c0_6 = arith.constant 0 : index
    %c0_7 = arith.constant 0 : index
    %9 = vector.load %arg7[%c0_6, %c0_7] : memref<16x32xf32, #tpu.memory_space<vmem>>, vector<16x32xf32>
    tpu.vector_store %arg7[%c0_6, %c0_7], %8 {strides = array<i32>} : memref<16x32xf32, #tpu.memory_space<vmem>>, vector<16x32xf32>,
    return
  }
  func.func @transform_0(%arg0: i32, %arg1: i32) -> (i32, i32) {
    %c0_i32 = arith.constant 0 : i32
    %c0_i32_0 = arith.constant 0 : i32
    return %arg0, %c0_i32 : i32, i32
  }
  func.func @transform_1(%arg0: i32, %arg1: i32) -> (i32, i32) {
    %c0_i32 = arith.constant 0 : i32
    %c0_i32_0 = arith.constant 0 : i32
    %c0_i32_1 = arith.constant 0 : i32
    return %c0_i32, %c0_i32_0 : i32, i32
  }
  func.func @transform_2(%arg0: i32, %arg1: i32) -> (i32, i32) {
    %c0_i32 = arith.constant 0 : i32
    %c0_i32_0 = arith.constant 0 : i32
    %c0_i32_1 = arith.constant 0 : i32
    return %c0_i32, %c0_i32_0 : i32, i32
  }
  func.func @transform_3(%arg0: i32, %arg1: i32) -> (i32, i32) {
    %c0_i32 = arith.constant 0 : i32
    %c0_i32_0 = arith.constant 0 : i32
    return %c0_i32, %arg1 : i32, i32
  }
  func.func @transform_4(%arg0: i32, %arg1: i32) -> (i32, i32) {
    %c0_i32 = arith.constant 0 : i32
    %c0_i32_0 = arith.constant 0 : i32
    return %c0_i32, %arg1 : i32, i32
  }
  func.func @transform_5(%arg0: i32, %arg1: i32) -> (i32, i32) {
    %c0_i32 = arith.constant 0 : i32
    return %arg0, %arg1 : i32, i32
  }
}

</mosaic_0001>

<llo_original>
// kernel: tpu_custom_call.1
$region0: #{tpu_custom_call.1}
  #allocation0 [shape = 'u32[]', space=smem, size = 0x4, offset = 0x4, fixed_abs, tag = 'smem constant byte address 0x4 - core index']
  #allocation1 [shape = 'u32[144,128]{1,0:T(1,128)}', space=vmem, size = 0x12000, scoped, tag = 'internal scratch']
  #allocation2 [shape = 'f32[16,32]{1,0:T(8,128)}', space=vmem, size = 0x2000, scoped, tag = 'scratch operand']
  %s0 = inlined_call_operand.hbm [shape: f32[16,32], index: 0, kind: input, shape index: {}]
  %s1 = inlined_call_operand.hbm [shape: f32[32,32], index: 1, kind: input, shape index: {}]
  %s2 = inlined_call_operand.vmem [shape: f32[1,32], index: 2, kind: input, shape index: {}]
  %s3 = inlined_call_operand.hbm [shape: f32[32,32], index: 3, kind: input, shape index: {}]
  %s4 = inlined_call_operand.vmem [shape: f32[1,32], index: 4, kind: input, shape index: {}]
  %s5 = inlined_call_operand.hbm [shape: f32[16,32], index: 5, kind: output, shape index: {}]
  %s6 = sld [smem:[#allocation0]]
  $region46: #{tpu_custom_call.1} parent=0
    _
  %s8 = ssub.s32 1, %s6
  %s9 = scalar_select 0, %s8, %s6
  $region1: #{tpu_custom_call.1} parent=0
    #allocation3 [shape = 'u8[8192]{0}', space=vmem, size = 0x2000, scoped, tag = 'input window, operand 0, single buffered']
    #allocation4 [shape = 's32[1]{0}', space=sflag, size = 0x4, scoped, tag = 'scoped memory for tpu_custom_call.1']
    #allocation5 [shape = 's32[1]{0}', space=sflag, size = 0x4, scoped, tag = 'scoped memory for tpu_custom_call.1']
    #allocation6 [shape = 'u8[16384]{0}', space=vmem, size = 0x4000, scoped, tag = 'input window, operand 1, single buffered']
    #allocation7 [shape = 's32[1]{0}', space=sflag, size = 0x4, scoped, tag = 'scoped memory for tpu_custom_call.1']
    #allocation8 [shape = 'u8[16384]{0}', space=vmem, size = 0x4000, scoped, tag = 'input window, operand 3, single buffered']
    #allocation9 [shape = 'u8[8192]{0}', space=vmem, size = 0x2000, scoped, tag = 'output window, operand 0, single buffered']
    %10 = vsyncpa [#allocation4], 0
    %11 = vsyncpa [#allocation7], 0
    %12 = vsyncpa [#allocation5], 0
    // Predicated region
    $region2: #{tpu_custom_call.1} parent=1 // pred_check
      _
    $region3: #{tpu_custom_call.1} parent=1 // pred_check_branch
      %14 = sbr.rel (0) target = $region5
    $region4: #{tpu_custom_call.1} parent=1 // pred_region
      %s16 = ssub.s32 256, 256
      %17 = vsyncadd [#allocation4], %s16
      %s18 = sshll.u32 [#allocation3], 4
      %s19 = int_to_ptr.vmem [resolvable:$true] %s18
      %24 = dma.hbm_to_vmem [thread:$0]  %s0, 256, %s19, [#allocation4], 128, 128, 8
    $region5: #{tpu_custom_call.1} parent=1 // pred_fallthru
      _
    // Predicated region
    $region6: #{tpu_custom_call.1} parent=1 // pred_check
      _
    $region7: #{tpu_custom_call.1} parent=1 // pred_check_branch
      %26 = sbr.rel (0) target = $region9
    $region8: #{tpu_custom_call.1} parent=1 // pred_region
      %s28 = ssub.s32 512, 512
      %29 = vsyncadd [#allocation7], %s28
      %s30 = sshll.u32 [#allocation6], 4
      %s31 = int_to_ptr.vmem [resolvable:$true] %s30
      %36 = dma.hbm_to_vmem [thread:$0]  %s1, 512, %s31, [#allocation7], 128, 128, 8
    $region9: #{tpu_custom_call.1} parent=1 // pred_fallthru
      _
    // Predicated region
    $region10: #{tpu_custom_call.1} parent=1 // pred_check
      _
    $region11: #{tpu_custom_call.1} parent=1 // pred_check_branch
      %38 = sbr.rel (0) target = $region13
    $region12: #{tpu_custom_call.1} parent=1 // pred_region
      _
    $region13: #{tpu_custom_call.1} parent=1 // pred_fallthru
      _
    // Predicated region
    $region14: #{tpu_custom_call.1} parent=1 // pred_check
      _
    $region15: #{tpu_custom_call.1} parent=1 // pred_check_branch
      %40 = sbr.rel (0) target = $region17
    $region16: #{tpu_custom_call.1} parent=1 // pred_region
      %s42 = ssub.s32 512, 512
      %43 = vsyncadd [#allocation7], %s42
      %s44 = sshll.u32 [#allocation8], 4
      %s45 = int_to_ptr.vmem [resolvable:$true] %s44
      %50 = dma.hbm_to_vmem [thread:$0]  %s3, 512, %s45, [#allocation7], 128, 128, 8
    $region17: #{tpu_custom_call.1} parent=1 // pred_fallthru
      _
    // Predicated region
    $region18: #{tpu_custom_call.1} parent=1 // pred_check
      _
    $region19: #{tpu_custom_call.1} parent=1 // pred_check_branch
      %52 = sbr.rel (0) target = $region21
    $region20: #{tpu_custom_call.1} parent=1 // pred_region
      _
    $region21: #{tpu_custom_call.1} parent=1 // pred_fallthru
      _
    // Predicated region
    $region22: #{tpu_custom_call.1} parent=1 // pred_check
      _
    $region23: #{tpu_custom_call.1} parent=1 // pred_check_branch
      %54 = sbr.rel (0) target = $region25
    $region24: #{tpu_custom_call.1} parent=1 // pred_region
      %55 = dma.done [#allocation4], 256
    $region25: #{tpu_custom_call.1} parent=1 // pred_fallthru
      _
    // Predicated region
    $region26: #{tpu_custom_call.1} parent=1 // pred_check
      _
    $region27: #{tpu_custom_call.1} parent=1 // pred_check_branch
      %57 = sbr.rel (0) target = $region29
    $region28: #{tpu_custom_call.1} parent=1 // pred_region
      %58 = dma.done [#allocation7], 512
    $region29: #{tpu_custom_call.1} parent=1 // pred_fallthru
      _
    // Predicated region
    $region30: #{tpu_custom_call.1} parent=1 // pred_check
      _
    $region31: #{tpu_custom_call.1} parent=1 // pred_check_branch
      %60 = sbr.rel (0) target = $region33
    $region32: #{tpu_custom_call.1} parent=1 // pred_region
      %61 = dma.done [#allocation7], 512
    $region33: #{tpu_custom_call.1} parent=1 // pred_fallthru
      _
    %p62 = scmp.eq.s32.totalorder 0, 0
    // Predicated region
    $region34: #{tpu_custom_call.1} parent=1 // pred_check
      %p63 = pneg %p62
    $region35: #{tpu_custom_call.1} parent=1 // pred_check_branch
      %65 = sbr.rel (%p63) target = $region37
    $region36: #{tpu_custom_call.1} parent=1 // pred_region
      %v66 = vld [vmem:[#allocation3] sm:$0xff]
      %v67 = vld [vmem:[#allocation3 + $0x8] sm:$0xff]
      %v68 = vld [vmem:[#allocation6] sm:$0xff]
      %v69 = vld [vmem:[#allocation6 + $0x8] sm:$0xff]
      %v70 = vld [vmem:[#allocation6 + $0x10] sm:$0xff]
      %v71 = vld [vmem:[#allocation6 + $0x18] sm:$0xff]
      %v72 = vld [vmem:[%s2] sm:$0x1]
      %v74 = vlaneseq
      %v75 = vshrl.u32 %v74, 7
      %v76 = vsub.s32 0, %v75
      %v77 = vrot.slane %v72, %v76
      %vm79 = vcmask 261120
      %v81 = vsel %vm79, %v66, 0
      %v84 = vsel %vm79, %v67, 0
      %86 = vmatprep.subr.mxu0 0.0
      %87 = vmatpush1.msra.mxu0 %v68
      %88 = vmatprep.subr.mxu0 0.0
      %89 = vmatpush1.msra.mxu0 %v69
      %90 = vmatprep.subr.mxu0 0.0
      %91 = vmatpush1.msra.mxu0 %v70
      %92 = vmatprep.subr.mxu0 0.0
      %93 = vmatpush1.msra.mxu0 %v71
      %94 = vmatprep.subr.mxu0 0.0
      %95 = vmatpush1.msra.mxu0 0.0
      %96 = vmatprep.subr.mxu0 0.0
      %97 = vmatpush1.msra.mxu0 0.0
      %98 = vmatprep.subr.mxu0 0.0
      %99 = vmatpush1.msra.mxu0 0.0
      %100 = vmatprep.subr.mxu0 0.0
      %101 = vmatpush1.msra.mxu0 0.0
      %102 = vmatprep.subr.mxu0 0.0
      %103 = vmatpush1.msra.mxu0 0.0
      %104 = vmatprep.subr.mxu0 0.0
      %105 = vmatpush1.msra.mxu0 0.0
      %106 = vmatprep.subr.mxu0 0.0
      %107 = vmatpush1.msra.mxu0 0.0
      %108 = vmatprep.subr.mxu0 0.0
      %109 = vmatpush1.msra.mxu0 0.0
      %110 = vmatprep.subr.mxu0 0.0
      %111 = vmatpush1.msra.mxu0 0.0
      %112 = vmatprep.subr.mxu0 0.0
      %113 = vmatpush1.msra.mxu0 0.0
      %114 = vmatprep.subr.mxu0 0.0
      %115 = vmatpush1.msra.mxu0 0.0
      %116 = vmatprep.subr.mxu0 0.0
      %117 = vmatpush1.msra.mxu0 0.0
      %118 = vmatprep.subr.mxu0 0.0
      %119 = vmatpush1.msra.mxu0 0.0
      %120 = vmatprep.subr.mxu0 0.0
      %121 = vmatpush1.msra.mxu0 0.0
      %122 = vmatprep.subr.mxu0 0.0
      %123 = vmatpush1.msra.mxu0 0.0
      %124 = vmatprep.subr.mxu0 0.0
      %125 = vmatpush1.msra.mxu0 0.0
      %126 = vmatprep.subr.mxu0 0.0
      %127 = vmatpush1.msra.mxu0 0.0
      %128 = vmatprep.subr.mxu0 0.0
      %129 = vmatpush1.msra.mxu0 0.0
      %130 = vmatprep.subr.mxu0 0.0
      %131 = vmatpush1.msra.mxu0 0.0
      %132 = vmatprep.subr.mxu0 0.0
      %133 = vmatpush1.msra.mxu0 0.0
      %134 = vmatprep.subr.mxu0 0.0
      %135 = vmatpush1.msra.mxu0 0.0
      %136 = vmatprep.subr.mxu0 0.0
      %137 = vmatpush1.msra.mxu0 0.0
      %138 = vmatprep.subr.mxu0 0.0
      %139 = vmatpush1.msra.mxu0 0.0
      %140 = vmatprep.subr.mxu0 0.0
      %141 = vmatpush1.msra.mxu0 0.0
      %142 = vmatprep.subr.mxu0 0.0
      %143 = vmatpush1.msra.mxu0 0.0
      %144 = vmatprep.subr.mxu0 0.0
      %145 = vmatpush1.msra.mxu0 0.0
      %146 = vmatprep.subr.mxu0 0.0
      %147 = vmatpush1.msra.mxu0 0.0
      %148 = vmatprep.subr.mxu0 0.0
      %149 = vmatpush1.msra.mxu0 0.0
      %150 = vmatprep.mubr.f32.mxu0 0.0
      %151 = vmatmul.mubr.f32.gmra.mrb[0].mxu0 %v81
      %v152 = vpop.f32.mrb[0].mxu0
      %v153 = vadd.f32 %v77, %v152
      %v154 = vpop.f32.mrb[0].mxu0
      %155 = vmatprep.mubr.f32.mxu0 0.0
      %156 = vmatmul.mubr.f32.gmra.mrb[0].mxu0 %v84
      %v157 = vpop.f32.mrb[0].mxu0
      %v158 = vadd.f32 %v77, %v157
      %v159 = vpop.f32.mrb[0].mxu0
      %160 = vdwg.mxu0
      %v161 = vmul.f32 %v153, 0.5
      %v162 = vmul.f32 %v158, 0.5
      %v163 = vmul.f32 %v153, 0.70710677
      %v164 = vmul.f32 %v158, 0.70710677
      %v165 = verf.f32.pop %v163
      %v166 = verf.f32.pop %v164
      %v167 = vadd.f32 %v165, 1.0
      %v168 = vadd.f32 %v166, 1.0
      %v169 = vmul.f32 %v161, %v167
      %v170 = vmul.f32 %v162, %v168
      %171 = vst.msk [vmem:[#allocation2] sm:$0xff] %vm79, %v169
      %172 = vst.msk [vmem:[#allocation2 + $0x8] sm:$0xff] %vm79, %v170
    $region37: #{tpu_custom_call.1} parent=1 // pred_fallthru
      _
    %v173 = vld [vmem:[#allocation2] sm:$0xff]
    %v174 = vld [vmem:[#allocation2 + $0x8] sm:$0xff]
    %v175 = vld [vmem:[#allocation8] sm:$0xff]
    %v176 = vld [vmem:[#allocation8 + $0x8] sm:$0xff]
    %v177 = vld [vmem:[#allocation8 + $0x10] sm:$0xff]
    %v178 = vld [vmem:[#allocation8 + $0x18] sm:$0xff]
    %v179 = vld [vmem:[%s4] sm:$0x1]
    %v181 = vlaneseq
    %v182 = vshrl.u32 %v181, 7
    %v183 = vsub.s32 0, %v182
    %v184 = vrot.slane %v179, %v183
    %vm186 = vcmask 261120
    %v188 = vsel %vm186, %v173, 0
    %v191 = vsel %vm186, %v174, 0
    %193 = vmatprep.subr.mxu0 0.0
    %194 = vmatpush1.msra.mxu0 %v175
    %195 = vmatprep.subr.mxu0 0.0
    %196 = vmatpush1.msra.mxu0 %v176
    %197 = vmatprep.subr.mxu0 0.0
    %198 = vmatpush1.msra.mxu0 %v177
    %199 = vmatprep.subr.mxu0 0.0
    %200 = vmatpush1.msra.mxu0 %v178
    %201 = vmatprep.subr.mxu0 0.0
    %202 = vmatpush1.msra.mxu0 0.0
    %203 = vmatprep.subr.mxu0 0.0
    %204 = vmatpush1.msra.mxu0 0.0
    %205 = vmatprep.subr.mxu0 0.0
    %206 = vmatpush1.msra.mxu0 0.0
    %207 = vmatprep.subr.mxu0 0.0
    %208 = vmatpush1.msra.mxu0 0.0
    %209 = vmatprep.subr.mxu0 0.0
    %210 = vmatpush1.msra.mxu0 0.0
    %211 = vmatprep.subr.mxu0 0.0
    %212 = vmatpush1.msra.mxu0 0.0
    %213 = vmatprep.subr.mxu0 0.0
    %214 = vmatpush1.msra.mxu0 0.0
    %215 = vmatprep.subr.mxu0 0.0
    %216 = vmatpush1.msra.mxu0 0.0
    %217 = vmatprep.subr.mxu0 0.0
    %218 = vmatpush1.msra.mxu0 0.0
    %219 = vmatprep.subr.mxu0 0.0
    %220 = vmatpush1.msra.mxu0 0.0
    %221 = vmatprep.subr.mxu0 0.0
    %222 = vmatpush1.msra.mxu0 0.0
    %223 = vmatprep.subr.mxu0 0.0
    %224 = vmatpush1.msra.mxu0 0.0
    %225 = vmatprep.subr.mxu0 0.0
    %226 = vmatpush1.msra.mxu0 0.0
    %227 = vmatprep.subr.mxu0 0.0
    %228 = vmatpush1.msra.mxu0 0.0
    %229 = vmatprep.subr.mxu0 0.0
    %230 = vmatpush1.msra.mxu0 0.0
    %231 = vmatprep.subr.mxu0 0.0
    %232 = vmatpush1.msra.mxu0 0.0
    %233 = vmatprep.subr.mxu0 0.0
    %234 = vmatpush1.msra.mxu0 0.0
    %235 = vmatprep.subr.mxu0 0.0
    %236 = vmatpush1.msra.mxu0 0.0
    %237 = vmatprep.subr.mxu0 0.0
    %238 = vmatpush1.msra.mxu0 0.0
    %239 = vmatprep.subr.mxu0 0.0
    %240 = vmatpush1.msra.mxu0 0.0
    %241 = vmatprep.subr.mxu0 0.0
    %242 = vmatpush1.msra.mxu0 0.0
    %243 = vmatprep.subr.mxu0 0.0
    %244 = vmatpush1.msra.mxu0 0.0
    %245 = vmatprep.subr.mxu0 0.0
    %246 = vmatpush1.msra.mxu0 0.0
    %247 = vmatprep.subr.mxu0 0.0
    %248 = vmatpush1.msra.mxu0 0.0
    %249 = vmatprep.subr.mxu0 0.0
    %250 = vmatpush1.msra.mxu0 0.0
    %251 = vmatprep.subr.mxu0 0.0
    %252 = vmatpush1.msra.mxu0 0.0
    %253 = vmatprep.subr.mxu0 0.0
    %254 = vmatpush1.msra.mxu0 0.0
    %255 = vmatprep.subr.mxu0 0.0
    %256 = vmatpush1.msra.mxu0 0.0
    %257 = vmatprep.mubr.f32.mxu0 0.0
    %258 = vmatmul.mubr.f32.gmra.mrb[0].mxu0 %v188
    %v259 = vpop.f32.mrb[0].mxu0
    %v260 = vadd.f32 %v184, %v259
    %v261 = vpop.f32.mrb[0].mxu0
    %262 = vmatprep.mubr.f32.mxu0 0.0
    %263 = vmatmul.mubr.f32.gmra.mrb[0].mxu0 %v191
    %v264 = vpop.f32.mrb[0].mxu0
    %v265 = vadd.f32 %v184, %v264
    %v266 = vpop.f32.mrb[0].mxu0
    %267 = vdwg.mxu0
    %268 = vst.msk [vmem:[#allocation9] sm:$0xff] %vm186, %v260
    %269 = vst.msk [vmem:[#allocation9 + $0x8] sm:$0xff] %vm186, %v265
    // Predicated region
    $region38: #{tpu_custom_call.1} parent=1 // pred_check
      _
    $region39: #{tpu_custom_call.1} parent=1 // pred_check_branch
      %271 = sbr.rel (0) target = $region41
    $region40: #{tpu_custom_call.1} parent=1 // pred_region
      %s273 = ssub.s32 256, 256
      %274 = vsyncadd [#allocation5], %s273
      %s275 = sshll.u32 [#allocation9], 4
      %s276 = int_to_ptr.vmem [resolvable:$true] %s275
      %281 = dma.vmem_to_hbm [thread:$0]  %s276, 256, %s5, [#allocation5], 128, 128, 8
    $region41: #{tpu_custom_call.1} parent=1 // pred_fallthru
      _
    // Predicated region
    $region42: #{tpu_custom_call.1} parent=1 // pred_check
      _
    $region43: #{tpu_custom_call.1} parent=1 // pred_check_branch
      %283 = sbr.rel (0) target = $region45
    $region44: #{tpu_custom_call.1} parent=1 // pred_region
      %284 = dma.done [#allocation5], 256
    $region45: #{tpu_custom_call.1} parent=1 // pred_fallthru
      _
    %285 = vsyncpa [#allocation4], 1
    %286 = vsyncpa [#allocation7], 1
    %287 = vsyncpa [#allocation5], 1

</llo_original>
